<compile_context>
chip_gen: v5e
topology: v5e:2x2
jax: 0.10.0
libtpu: 0.0.40
codegen_flags: <defaults>
</compile_context>

<pallas_src>
import functools

import jax
import jax.numpy as jnp
from jax.experimental import pallas as pl
from jax.experimental.pallas import tpu as pltpu


def _normalizer_kernel(x_ref, ab_ref, o_ref, *, channel_norm: bool):
    # x_ref: (tN, C, tL) block; ab_ref: (2, C, 1) folded per-channel consts (f32).
    x = x_ref[...].astype(jnp.float32)
    ab = ab_ref[...]
    a = ab[0:1]                                   # (1, C, 1)
    b = ab[1:2]                                   # (1, C, 1)

    if channel_norm:
        C = x.shape[1]
        # Single-pass variance: one fewer full-block VMEM temp / VPU pass than
        # the two-pass (x - mu) formulation.  Guarded for non-negativity.
        inv_c = 1.0 / C
        s1 = jnp.sum(x, axis=1, keepdims=True)            # (tN, 1, tL)
        s2 = jnp.sum(x * x, axis=1, keepdims=True)        # (tN, 1, tL)
        mu = s1 * inv_c
        bessel = (C / (C - 1)) if C > 1 else float("inf")  # torch.std is unbiased
        var_unb = jnp.maximum(s2 * inv_c - mu * mu, 0.0) * bessel
        y = jnp.sqrt(var_unb) + 1e-5
        # EUP approximate reciprocal + one Newton step -> full f32 accuracy
        # while keeping the divide off the VALU; operates on the C-reduced
        # (tN, 1, tL) tensor, so it is ~1/C of a block pass.
        r = pl.reciprocal(y, approx=True)
        r = r * (2.0 - y * r)
        x = (x - mu) * r

    o_ref[...] = (x * a + b).astype(o_ref.dtype)


def _divisors_desc(n: int):
    return [d for d in range(n, 0, -1) if n % d == 0]


def _choose_tiles(N: int, C: int, L_pad: int, eff_itemsize: int, *,
                  max_block_bytes: int, max_tl: int = 1024, min_grid: int = 8):
    """Pick (tL, tN).

    Preference order:
      1. tL = largest multiple-of-128 divisor of L_pad that is <= max_tl
         (long contiguous HBM rows, lane-dense stores).
      2. Shrink tN first (then tL, but never below 512) until the grid has at
         least `min_grid` iterations (feeds both v7x TCs + the pipeline).
      3. Keep one block under `max_block_bytes` (f32-equivalent footprint).
    """
    tl_cands = [t for t in range(min(max_tl, L_pad), 127, -128) if L_pad % t == 0]
    if not tl_cands:                       # unreachable when L_pad % 128 == 0
        tl_cands = [L_pad]
    n_divs = _divisors_desc(N)

    def max_fitting_tn(tL):
        for tn in n_divs:
            if tn * C * tL * eff_itemsize <= max_block_bytes:
                return tn
        return 1

    first_choice = None
    for tL in tl_cands:
        tn_cap = max_fitting_tn(tL)
        if first_choice is None:
            first_choice = (tL, tn_cap)
        for tn in n_divs:                   # descending: first hit = largest tn
            if tn > tn_cap:
                continue
            if (N // tn) * (L_pad // tL) >= min_grid:
                return tL, tn
        if tL <= 512:
            break                           # don't shorten HBM rows below ~512 elems
    return first_choice                     # small input: grid < min_grid unavoidable


def normalizer_forward(x, moving_average, moving_variance, scale, bias,
                       *, channel_norm: bool = True):
    """Eval-mode Normalizer forward.

    x: (N, C, L); params/buffers: (1, C, 1) (as registered in the module).
    """
    N, C, L = x.shape

    # Fold running-stat normalization + affine into two per-channel constants,
    # packed into one (2, C, 1) f32 operand (single DMA/buffer pair).
    ma = moving_average.astype(jnp.float32).reshape(1, C, 1)
    mv = moving_variance.astype(jnp.float32).reshape(1, C, 1)
    sc = scale.astype(jnp.float32).reshape(1, C, 1)
    bi = bias.astype(jnp.float32).reshape(1, C, 1)
    A = jnp.abs(sc) / (jnp.sqrt(mv) + 1e-5)
    B = bi - ma * A
    AB = jnp.concatenate([A, B], axis=0)                    # (2, C, 1)

    # Pad L to a multiple of 128: lane-dense, unmasked output stores.  Padded
    # columns are independent (reduction is over C) and sliced off afterwards.
    L_pad = ((L + 127) // 128) * 128
    x_in = x if L_pad == L else jnp.pad(x, ((0, 0), (0, 0), (0, L_pad - L)))

    itemsize = jnp.dtype(x.dtype).itemsize
    try:
        vmem_cap = int(pltpu.get_tpu_info().vmem_capacity_bytes)
    except Exception:
        vmem_cap = 64 * 1024 * 1024          # conservative (v7x per-TC) fallback

    # Budget blocks against their f32-equivalent footprint (in-kernel temps are
    # f32 even for narrow input dtypes).  ~2 MiB sits on the HBM roofline.
    eff_item = max(itemsize, 4)
    max_block_bytes = min(2 * 1024 * 1024, vmem_cap // 24)
    tL, tN = _choose_tiles(N, C, L_pad, eff_item, max_block_bytes=max_block_bytes)

    grid = (N // tN, L_pad // tL)
    block_elems = tN * C * tL
    # 2x(in + out) double buffers + full-block f32 temps, with slack; never
    # above 75% of this generation's physical VMEM.
    vmem_need = 8 * block_elems * (itemsize + 4)
    vmem_limit = int(min(0.75 * vmem_cap, max(32 * 1024 * 1024, vmem_need)))

    kernel = functools.partial(_normalizer_kernel, channel_norm=channel_norm)

    out = pl.pallas_call(
        kernel,
        out_shape=jax.ShapeDtypeStruct((N, C, L_pad), x.dtype),
        grid_spec=pltpu.PrefetchScalarGridSpec(
            num_scalar_prefetch=0,
            grid=grid,
            in_specs=[
                pl.BlockSpec((tN, C, tL), lambda n, l: (n, 0, l)),
                pl.BlockSpec((2, C, 1), lambda n, l: (0, 0, 0)),
            ],
            out_specs=pl.BlockSpec((tN, C, tL), lambda n, l: (n, 0, l)),
        ),
        compiler_params=pltpu.CompilerParams(
            dimension_semantics=("parallel", "parallel"),
            vmem_limit_bytes=vmem_limit),
    )(x_in, AB)

    return out if L_pad == L else out[:, :, :L]


def normalizer_reference(x, moving_average, moving_variance, scale, bias,
                         *, channel_norm: bool = True):
    """Pure-JAX reference mirroring the PyTorch eval-mode forward."""
    x = x.astype(jnp.float32)
    if channel_norm:
        mu = jnp.mean(x, axis=1, keepdims=True)
        std = jnp.std(x, axis=1, keepdims=True, ddof=1)  # torch.std is unbiased
        x = (x - mu) / (std + 1e-5)
    x = (x - moving_average) / (jnp.sqrt(moving_variance) + 1e-5)
    x = x * jnp.abs(scale) + bias
    return x


def _run_case(key, N, C, L, channel_norm):
    k_x, k_ma, k_mv, k_sc, k_bi = jax.random.split(key, 5)
    x = jax.random.normal(k_x, (N, C, L), dtype=jnp.float32)
    moving_average = 0.1 * jax.random.normal(k_ma, (1, C, 1), dtype=jnp.float32)
    moving_variance = 1.0 + 0.1 * jax.random.uniform(k_mv, (1, C, 1), dtype=jnp.float32)
    bn_scale = 1.0 + 0.1 * jax.random.normal(k_sc, (1, C, 1), dtype=jnp.float32)
    bn_bias = 0.1 * jax.random.normal(k_bi, (1, C, 1), dtype=jnp.float32)

    out = normalizer_forward(x, moving_average, moving_variance,
                             bn_scale, bn_bias, channel_norm=channel_norm)
    out = jax.block_until_ready(out)
    ref = normalizer_reference(x, moving_average, moving_variance,
                               bn_scale, bn_bias, channel_norm=channel_norm)

    assert out.shape == (N, C, L)
    assert jnp.allclose(out, ref, atol=1e-4, rtol=1e-4), (
        f"({N},{C},{L},cn={channel_norm}) max abs err "
        f"{jnp.max(jnp.abs(out - ref))}")


if __name__ == "__main__":
    key = jax.random.PRNGKey(0)
    k1, k2, k3 = jax.random.split(key, 3)

    # (batch, numChannels, sequence length)
    _run_case(k1, N=2, C=8, L=128, channel_norm=True)    # aligned L
    _run_case(k2, N=2, C=8, L=200, channel_norm=True)    # exercises L padding path
    _run_case(k3, N=2, C=8, L=128, channel_norm=False)   # channelNorm disabled

    print("KERNEL_OK")
</pallas_src>

<mosaic_0001>
module attributes {stable_mosaic.version = 11 : i64} {
  func.func @_normalizer_kernel(%arg0: i32, %arg1: i32, %arg2: memref<2x8x128xf32, #tpu.memory_space<vmem>>, %arg3: memref<2x8x1xf32, #tpu.memory_space<vmem>>, %arg4: memref<2x8x128xf32, #tpu.memory_space<vmem>>) attributes {dimension_semantics = [#tpu.dimension_semantics<parallel>, #tpu.dimension_semantics<parallel>], iteration_bounds = array<i64: 1, 1>, scalar_prefetch = 0 : i64, scratch_operands = 0 : i64, tpu.core_type = #tpu.core_type<tc>, window_params = [{transform_indices = @transform_0, window_bounds = array<i64: 2, 8, 128>}, {pipeline_mode = #tpu.pipeline_mode<synchronous>, transform_indices = @transform_1, window_bounds = array<i64: 2, 8, 1>}, {transform_indices = @transform_2, window_bounds = array<i64: 2, 8, 128>}]} {
    %c0 = arith.constant 0 : index
    %c0_0 = arith.constant 0 : index
    %c0_1 = arith.constant 0 : index
    %0 = vector.load %arg2[%c0, %c0_0, %c0_1] : memref<2x8x128xf32, #tpu.memory_space<vmem>>, vector<2x8x128xf32>
    %c0_2 = arith.constant 0 : index
    %c0_3 = arith.constant 0 : index
    %c0_4 = arith.constant 0 : index
    %1 = vector.load %arg3[%c0_2, %c0_3, %c0_4] : memref<2x8x1xf32, #tpu.memory_space<vmem>>, vector<2x8x1xf32>
    %2 = vector.extract_strided_slice %1 {offsets = [0, 0, 0], sizes = [1, 8, 1], strides = [1, 1, 1]} : vector<2x8x1xf32> to vector<1x8x1xf32>
    %3 = vector.extract_strided_slice %1 {offsets = [1, 0, 0], sizes = [1, 8, 1], strides = [1, 1, 1]} : vector<2x8x1xf32> to vector<1x8x1xf32>
    %cst = arith.constant dense<0.000000e+00> : vector<2x128xf32>
    %4 = vector.multi_reduction <add>, %0, %cst [1] : vector<2x8x128xf32> to vector<2x128xf32>
    %5 = vector.shape_cast %4 : vector<2x128xf32> to vector<2x1x128xf32>
    %6 = arith.mulf %0, %0 : vector<2x8x128xf32>
    %cst_5 = arith.constant dense<0.000000e+00> : vector<2x128xf32>
    %7 = vector.multi_reduction <add>, %6, %cst_5 [1] : vector<2x8x128xf32> to vector<2x128xf32>
    %8 = vector.shape_cast %7 : vector<2x128xf32> to vector<2x1x128xf32>
    %cst_6 = arith.constant 1.250000e-01 : f32
    %9 = vector.broadcast %cst_6 : f32 to vector<2x1x128xf32>
    %10 = arith.mulf %5, %9 : vector<2x1x128xf32>
    %cst_7 = arith.constant 1.250000e-01 : f32
    %11 = vector.broadcast %cst_7 : f32 to vector<2x1x128xf32>
    %12 = arith.mulf %8, %11 : vector<2x1x128xf32>
    %13 = arith.mulf %10, %10 : vector<2x1x128xf32>
    %14 = arith.subf %12, %13 : vector<2x1x128xf32>
    %cst_8 = arith.constant 0.000000e+00 : f32
    %15 = vector.broadcast %cst_8 : f32 to vector<2x1x128xf32>
    %16 = arith.maximumf %14, %15 : vector<2x1x128xf32>
    %cst_9 = arith.constant 1.14285719 : f32
    %17 = vector.broadcast %cst_9 : f32 to vector<2x1x128xf32>
    %18 = arith.mulf %16, %17 : vector<2x1x128xf32>
    %19 = math.sqrt %18 : vector<2x1x128xf32>
    %cst_10 = arith.constant 9.99999974E-6 : f32
    %20 = vector.broadcast %cst_10 : f32 to vector<2x1x128xf32>
    %21 = arith.addf %19, %20 : vector<2x1x128xf32>
    %22 = tpu.reciprocal %21 {approx = true} : vector<2x1x128xf32> -> vector<2x1x128xf32>
    %23 = arith.mulf %21, %22 : vector<2x1x128xf32>
    %cst_11 = arith.constant 2.000000e+00 : f32
    %24 = vector.broadcast %cst_11 : f32 to vector<2x1x128xf32>
    %25 = arith.subf %24, %23 : vector<2x1x128xf32>
    %26 = arith.mulf %22, %25 : vector<2x1x128xf32>
    %27 = vector.broadcast %10 : vector<2x1x128xf32> to vector<2x8x128xf32>
    %28 = arith.subf %0, %27 : vector<2x8x128xf32>
    %29 = vector.broadcast %26 : vector<2x1x128xf32> to vector<2x8x128xf32>
    %30 = arith.mulf %28, %29 : vector<2x8x128xf32>
    %31 = vector.broadcast %2 : vector<1x8x1xf32> to vector<2x8x128xf32>
    %32 = arith.mulf %30, %31 : vector<2x8x128xf32>
    %33 = vector.broadcast %3 : vector<1x8x1xf32> to vector<2x8x128xf32>
    %34 = arith.addf %32, %33 : vector<2x8x128xf32>
    %c0_12 = arith.constant 0 : index
    %c0_13 = arith.constant 0 : index
    %c0_14 = arith.constant 0 : index
    %35 = vector.load %arg4[%c0_12, %c0_13, %c0_14] : memref<2x8x128xf32, #tpu.memory_space<vmem>>, vector<2x8x128xf32>
    tpu.vector_store %arg4[%c0_12, %c0_13, %c0_14], %34 {strides = array<i32>} : memref<2x8x128xf32, #tpu.memory_space<vmem>>, vector<2x8x128xf32>,
    return
  }
  func.func @transform_0(%arg0: i32, %arg1: i32) -> (i32, i32, i32) {
    %c0_i32 = arith.constant 0 : i32
    %c0_i32_0 = arith.constant 0 : i32
    return %arg0, %c0_i32, %arg1 : i32, i32, i32
  }
  func.func @transform_1(%arg0: i32, %arg1: i32) -> (i32, i32, i32) {
    %c0_i32 = arith.constant 0 : i32
    %c0_i32_0 = arith.constant 0 : i32
    %c0_i32_1 = arith.constant 0 : i32
    %c0_i32_2 = arith.constant 0 : i32
    return %c0_i32, %c0_i32_0, %c0_i32_1 : i32, i32, i32
  }
  func.func @transform_2(%arg0: i32, %arg1: i32) -> (i32, i32, i32) {
    %c0_i32 = arith.constant 0 : i32
    %c0_i32_0 = arith.constant 0 : i32
    return %arg0, %c0_i32, %arg1 : i32, i32, i32
  }
}

</mosaic_0001>

<llo_original>
// kernel: tpu_custom_call.1
$region0: #{tpu_custom_call.1}
  #allocation0 [shape = 'u32[]', space=smem, size = 0x4, offset = 0x4, fixed_abs, tag = 'smem constant byte address 0x4 - core index']
  #allocation1 [shape = 'u32[72,128]{1,0:T(1,128)}', space=vmem, size = 0x9000, scoped, tag = 'internal scratch']
  %s0 = inlined_call_operand.vmem [shape: f32[2,8,128], index: 0, kind: input, shape index: {}]
  %s1 = inlined_call_operand.vmem [shape: f32[2,8,1], index: 1, kind: input, shape index: {}]
  %s2 = inlined_call_operand.hbm [shape: f32[2,8,128], index: 2, kind: output, shape index: {}]
  %s3 = sld [smem:[#allocation0]]
  $region18: #{tpu_custom_call.1} parent=0
    _
  %s5 = ssub.s32 1, %s3
  %s6 = scalar_select 0, %s5, %s3
  $region1: #{tpu_custom_call.1} parent=0
    #allocation2 [shape = 'u8[8192]{0}', space=vmem, size = 0x2000, scoped, tag = 'output window, operand 0, single buffered']
    #allocation3 [shape = 's32[1]{0}', space=sflag, size = 0x4, scoped, tag = 'scoped memory for tpu_custom_call.1']
    %7 = vsyncpa [#allocation3], 0
    // Predicated region
    $region2: #{tpu_custom_call.1} parent=1 // pred_check
      _
    $region3: #{tpu_custom_call.1} parent=1 // pred_check_branch
      %9 = sbr.rel (0) target = $region5
    $region4: #{tpu_custom_call.1} parent=1 // pred_region
      _
    $region5: #{tpu_custom_call.1} parent=1 // pred_fallthru
      _
    // Predicated region
    $region6: #{tpu_custom_call.1} parent=1 // pred_check
      _
    $region7: #{tpu_custom_call.1} parent=1 // pred_check_branch
      %11 = sbr.rel (0) target = $region9
    $region8: #{tpu_custom_call.1} parent=1 // pred_region
      _
    $region9: #{tpu_custom_call.1} parent=1 // pred_fallthru
      _
    %v12 = vld [vmem:[%s0] sm:$0xff]
    %v13 = vld [vmem:[%s0 + $0x8] sm:$0xff]
    %v14 = vld [vmem:[%s1] sm:$0xff]
    %v15 = vld [vmem:[%s1 + $0x8] sm:$0xff]
    %v16 = vrot.slane %v12, 4
    %v17 = vadd.f32 %v12, %v16
    %v18 = vrot.slane %v17, 2
    %v19 = vadd.f32 %v17, %v18
    %v20 = vrot.slane %v19, 1
    %v21 = vadd.f32 %v19, %v20
    %v22 = vrot.slane %v13, 4
    %v23 = vadd.f32 %v13, %v22
    %v24 = vrot.slane %v23, 2
    %v25 = vadd.f32 %v23, %v24
    %v26 = vrot.slane %v25, 1
    %v27 = vadd.f32 %v25, %v26
    %v28 = vmul.f32 %v12, %v12
    %v29 = vmul.f32 %v13, %v13
    %v30 = vrot.slane %v28, 4
    %v31 = vadd.f32 %v28, %v30
    %v32 = vrot.slane %v31, 2
    %v33 = vadd.f32 %v31, %v32
    %v34 = vrot.slane %v33, 1
    %v35 = vadd.f32 %v33, %v34
    %v36 = vrot.slane %v29, 4
    %v37 = vadd.f32 %v29, %v36
    %v38 = vrot.slane %v37, 2
    %v39 = vadd.f32 %v37, %v38
    %v40 = vrot.slane %v39, 1
    %v41 = vadd.f32 %v39, %v40
    %v42 = vmul.f32 %v21, 0.125
    %v43 = vmul.f32 %v27, 0.125
    %v44 = vmul.f32 %v35, 0.125
    %v45 = vmul.f32 %v41, 0.125
    %v46 = vmul.f32 %v42, %v42
    %v47 = vmul.f32 %v43, %v43
    %v48 = vsub.f32 %v44, %v46
    %v49 = vsub.f32 %v45, %v47
    %v50 = vmax.f32 %v48, 0.0
    %v51 = vmax.f32 %v49, 0.0
    %v52 = vmul.f32 %v50, 1.1428572
    %v53 = vmul.f32 %v51, 1.1428572
    %v54 = vrsqrt.pop %v52
    %v55 = vmul.f32 %v54, %v52
    %v56 = vmul.f32 %v55, %v54
    %v57 = vmul.f32 0.5, %v56
    %v58 = vsub.f32 1.5, %v57
    %v59 = vmul.f32 %v54, %v58
    %v60 = vmul.f32 %v52, %v59
    %vm61 = vcmp.eq.f32.partialorder %v52, inf
    %v62 = vsel %vm61, %v52, %v60
    %vm63 = vcmp.eq.f32.partialorder %v52, 0.0
    %v64 = vand.u32 %v52, 2147483648
    %v65 = vsel %vm63, %v64, %v62
    %v66 = vrsqrt.pop %v53
    %v67 = vmul.f32 %v66, %v53
    %v68 = vmul.f32 %v67, %v66
    %v69 = vmul.f32 0.5, %v68
    %v70 = vsub.f32 1.5, %v69
    %v71 = vmul.f32 %v66, %v70
    %v72 = vmul.f32 %v53, %v71
    %vm73 = vcmp.eq.f32.partialorder %v53, inf
    %v74 = vsel %vm73, %v53, %v72
    %vm75 = vcmp.eq.f32.partialorder %v53, 0.0
    %v76 = vand.u32 %v53, 2147483648
    %v77 = vsel %vm75, %v76, %v74
    %v78 = vadd.f32 %v65, 1e-05
    %v79 = vadd.f32 %v77, 1e-05
    %v80 = vrcp.pop %v78
    %v81 = vrcp.pop %v79
    %v82 = vmul.f32 %v78, %v80
    %v83 = vmul.f32 %v79, %v81
    %v84 = vsub.f32 2.0, %v82
    %v85 = vsub.f32 2.0, %v83
    %v86 = vmul.f32 %v80, %v84
    %v87 = vmul.f32 %v81, %v85
    %v88 = vsub.f32 %v12, %v42
    %v89 = vsub.f32 %v13, %v43
    %v90 = vmul.f32 %v88, %v86
    %v91 = vmul.f32 %v89, %v87
    %93 = vset.pattern.permute.xlu0 0
    %94 = vperm.xlu0 %93, %v14
    %v95 = vpop.permute.xlu0 %94
    %v97 = vmul.f32 %v90, %v95
    %v98 = vmul.f32 %v91, %v95
    %100 = vset.pattern.permute.xlu0 0
    %101 = vperm.xlu0 %100, %v15
    %v102 = vpop.permute.xlu0 %101
    %v104 = vadd.f32 %v97, %v102
    %v105 = vadd.f32 %v98, %v102
    %106 = vst [vmem:[#allocation2] sm:$0xff] %v104
    %107 = vst [vmem:[#allocation2 + $0x8] sm:$0xff] %v105
    // Predicated region
    $region10: #{tpu_custom_call.1} parent=1 // pred_check
      _
    $region11: #{tpu_custom_call.1} parent=1 // pred_check_branch
      %109 = sbr.rel (0) target = $region13
    $region12: #{tpu_custom_call.1} parent=1 // pred_region
      %111 = vsyncadd [#allocation3], 0
      %s112 = sshll.u32 [#allocation2], 4
      %s113 = int_to_ptr.vmem [resolvable:$true] %s112
      %s114 = sshll.u32 %s2, 4
      %s115 = int_to_ptr.hbm [resolvable:$true] %s114
      %120 = dma.vmem_to_hbm [thread:$0]  %s113, 256, %s115, [#allocation3], 128, 128, 8
    $region13: #{tpu_custom_call.1} parent=1 // pred_fallthru
      _
    // Predicated region
    $region14: #{tpu_custom_call.1} parent=1 // pred_check
      _
    $region15: #{tpu_custom_call.1} parent=1 // pred_check_branch
      %122 = sbr.rel (0) target = $region17
    $region16: #{tpu_custom_call.1} parent=1 // pred_region
      %124 = dma.done [#allocation3], 256
    $region17: #{tpu_custom_call.1} parent=1 // pred_fallthru
      _
    %125 = vsyncpa [#allocation3], 1

</llo_original>
